<compile_context>
chip_gen: v6e
topology: v6e:2x2x1
jax: 0.10.0
libtpu: 0.0.40
codegen_flags: <defaults>
</compile_context>

<pallas_src>
import jax
import jax.numpy as jnp
from jax.experimental import pallas as pl
from jax.experimental.pallas import tpu as pltpu


# ---------------------------------------------------------------------------
# 1) True Identity: plain passthrough (the module's forward pass).
# ---------------------------------------------------------------------------
def identity(x: jax.Array) -> jax.Array:
    """Forward pass of Identity: returns x unchanged (zero data movement)."""
    return x


# ---------------------------------------------------------------------------
# 2) Aliased pallas_call boundary: output buffer == input buffer.
# ---------------------------------------------------------------------------
def _alias_kernel(x_ref, o_ref):
    # x_ref and o_ref alias the same HBM buffer (input_output_aliases={0: 0});
    # the "result" already lives in the output buffer: nothing to do.
    del x_ref, o_ref


def identity_donate(x: jax.Array) -> jax.Array:
    """Identity through a pallas_call boundary with an aliased (donated) input.

    Only use when a kernel boundary is strictly required; the caller should
    treat `x` as donated (XLA copies defensively if `x` is used afterwards).
    """
    if x.ndim == 0 or x.size == 0:
        return x
    return pl.pallas_call(
        _alias_kernel,
        out_shape=jax.ShapeDtypeStruct(x.shape, x.dtype),
        in_specs=[pl.BlockSpec(memory_space=pl.ANY)],
        out_specs=pl.BlockSpec(memory_space=pl.ANY),
        input_output_aliases={0: 0},
    )(x)


# ---------------------------------------------------------------------------
# 3) Materialized copy: direct HBM -> HBM DMA (no VMEM staging).
# ---------------------------------------------------------------------------
def _dma_identity_kernel(x_ref, o_ref, sem_ref):
    # Single whole-array HBM->HBM DMA; the DMA engine does the copy, the
    # TensorCore only issues one descriptor and waits.
    cp = pltpu.make_async_copy(x_ref, o_ref, sem_ref)
    cp.start()
    cp.wait()


def _make_chunked_dma_kernel(chunk_rows: int):
    # One DMA per grid step over disjoint leading-dim chunks.  With
    # dimension_semantics=("parallel",) the chunks are sharded across both
    # TensorCores on v7x, so each TC issues its own DMA descriptor.
    def kernel(x_ref, o_ref, sem_ref):
        i = pl.program_id(0)
        start = pl.multiple_of(i * chunk_rows, chunk_rows)
        cp = pltpu.make_async_copy(
            x_ref.at[pl.ds(start, chunk_rows)],
            o_ref.at[pl.ds(start, chunk_rows)],
            sem_ref,
        )
        cp.start()
        cp.wait()

    return kernel


def identity_copy(
    x: jax.Array,
    *,
    num_chunks: int = 2,
    min_pallas_elems: int = 65536,
) -> jax.Array:
    """Identity that materializes a new output buffer via HBM->HBM DMA."""
    if x.ndim == 0 or x.size == 0:
        return jnp.copy(x)
    if x.size < min_pallas_elems:
        # Tiny arrays: fixed pallas_call launch/grid overhead dominates the
        # actual copy time; let XLA handle it.
        return jnp.copy(x)

    lead = x.shape[0]
    nchunks = max(1, min(num_chunks, lead))
    # Only split when the leading dim divides evenly: static chunk size, no
    # ragged tail, no padding, no wrapper-side slicing passes.
    if nchunks > 1 and lead % nchunks != 0:
        nchunks = 1

    out_shape = jax.ShapeDtypeStruct(x.shape, x.dtype)

    if nchunks == 1:
        # Single whole-array DMA (no grid at all).
        return pl.pallas_call(
            _dma_identity_kernel,
            out_shape=out_shape,
            in_specs=[pl.BlockSpec(memory_space=pl.ANY)],
            out_specs=pl.BlockSpec(memory_space=pl.ANY),
            scratch_shapes=[pltpu.SemaphoreType.DMA],
        )(x)

    chunk_rows = lead // nchunks
    return pl.pallas_call(
        _make_chunked_dma_kernel(chunk_rows),
        out_shape=out_shape,
        grid=(nchunks,),
        in_specs=[pl.BlockSpec(memory_space=pl.ANY)],
        out_specs=pl.BlockSpec(memory_space=pl.ANY),
        scratch_shapes=[pltpu.SemaphoreType.DMA],
        compiler_params=pltpu.CompilerParams(
            # Disjoint chunks: let v7x's two TensorCores each issue DMAs;
            # harmless (sequential) on single-TC v5e/v6e.
            dimension_semantics=("parallel",),
        ),
    )(x)


if __name__ == "__main__":
    k0, k1, k2 = jax.random.split(jax.random.PRNGKey(0), 3)

    # Small NCHW-style input consistent with an image-augmentation module.
    x = jax.random.normal(k0, (2, 4, 16, 16), dtype=jnp.float32)

    # 1) True Identity: plain passthrough (zero cost, the module's semantics).
    y = identity(x)
    assert y is x

    # 2) Aliased pallas_call boundary (empty kernel, output aliases input HBM).
    y1 = identity_donate(x)
    jax.block_until_ready(y1)
    assert y1.shape == x.shape and y1.dtype == x.dtype
    assert bool(jnp.all(y1 == x))

    # 3) Materialized copy: tiny input -> plain XLA copy fallback.
    y2 = identity_copy(x)
    jax.block_until_ready(y2)
    assert y2.shape == x.shape and y2.dtype == x.dtype
    assert bool(jnp.all(y2 == x))

    # 4) Force the chunked HBM->HBM DMA kernel on the small input
    #    (leading dim 2 -> two parallel chunks).
    y3 = identity_copy(x, min_pallas_elems=0)
    jax.block_until_ready(y3)
    assert y3.shape == x.shape and y3.dtype == x.dtype
    assert bool(jnp.all(y3 == x))

    # 5) Single whole-array DMA: odd leading dim (3) and a non-128-aligned last
    #    dim (130) -- no padding, no slicing, byte-exact copy.
    x5 = jax.random.normal(k1, (3, 4, 64, 130), dtype=jnp.float32)
    y5 = identity_copy(x5)
    jax.block_until_ready(y5)
    assert y5.shape == x5.shape and y5.dtype == x5.dtype
    assert bool(jnp.all(y5 == x5))

    # 6) Sub-32-bit dtype through the chunked DMA path (no sublane-packing
    #    concerns because nothing is staged through VMEM).
    x6 = jax.random.normal(k2, (2, 4, 16, 18), dtype=jnp.bfloat16)
    y6 = identity_copy(x6, min_pallas_elems=0)
    jax.block_until_ready(y6)
    assert y6.shape == x6.shape and y6.dtype == jnp.bfloat16
    assert bool(jnp.all(y6 == x6))

    print("KERNEL_OK")
</pallas_src>

<mosaic_0001>
module attributes {stable_mosaic.version = 11 : i64} {
  func.func @_alias_kernel(%arg0: memref<2x4x16x16xf32, #tpu.memory_space<any>>, %arg1: memref<2x4x16x16xf32, #tpu.memory_space<any>>) attributes {dimension_semantics = [], scalar_prefetch = 0 : i64, scratch_operands = 0 : i64, tpu.core_type = #tpu.core_type<tc>} {
    return
  }
}

</mosaic_0001>

<llo_original>
// kernel: tpu_custom_call.1
$region0: #{tpu_custom_call.1}
  #allocation0 [shape = 'u32[]', space=smem, size = 0x4, offset = 0x4, fixed_abs, tag = 'smem constant byte address 0x4 - core index']
  #allocation1 [shape = 'u32[144,128]{1,0:T(1,128)}', space=vmem, size = 0x12000, scoped, tag = 'internal scratch']
  %s0 = inlined_call_operand.hbm [shape: f32[2,4,16,16], index: 0, kind: input, shape index: {}, may-alias: {0,1}]
  %s1 = inlined_call_operand.hbm [shape: f32[2,4,16,16], index: 1, kind: output, shape index: {}, may-alias: {0,1}]
  %s2 = sld [smem:[#allocation0]]
  $region2: #{tpu_custom_call.1} parent=0
    _
  %s4 = ssub.s32 1, %s2
  %s5 = scalar_select 0, %s4, %s2

</llo_original>
